<compile_context>
chip_gen: v5e
topology: v5e:2x2
jax: 0.10.0
libtpu: 0.0.40
codegen_flags: <defaults>
</compile_context>

<pallas_src>
import numpy as np
import jax
import jax.numpy as jnp
from jax.experimental import pallas as pl
from jax.experimental.pallas import tpu as pltpu

LANE = 128  # TPU lane width; FC output is padded to this so stores are lane-dense.


def _round_up(n, m):
    return ((n + m - 1) // m) * m


# ----------------------------------------------------------------------------- kernel

def _fused_conv_bn_relu(h, w, t):
    """One Conv1d(k=3, pad=1) + folded-BN + ReLU block.

    h: (TB, L, C) activations (channels on the lane axis).
    w: (3*C, Cout) folded weights, tap-major rows: [tap l-1 | tap l | tap l+1].
    t: (1, Cout) folded bias/shift.
    """
    tb, L, c = h.shape
    zero = jnp.zeros((tb, 1, c), h.dtype)
    h_prev = jnp.concatenate([zero, h[:, :-1, :]], axis=1)   # per-sample shift down (pad top)
    h_next = jnp.concatenate([h[:, 1:, :], zero], axis=1)    # per-sample shift up (pad bottom)
    # Fuse the 3 taps into a single MXU matmul: (TB*L, 3C) @ (3C, Cout).
    taps = jnp.concatenate([h_prev, h, h_next], axis=-1)     # (TB, L, 3C)
    y = jnp.dot(taps.reshape(tb * L, 3 * c), w,
                preferred_element_type=jnp.float32)
    y = jnp.maximum(y + t, 0.0)                              # conv bias + BN folded into w, t
    return y.reshape(tb, L, -1)


def conv1d_model_kernel(x_ref,
                        w1_ref, t1_ref, w2_ref, t2_ref, w3_ref, t3_ref,
                        wfc_ref, bfc_ref,
                        out_ref):
    tb, L, _ = x_ref.shape
    h = _fused_conv_bn_relu(x_ref[...], w1_ref[...], t1_ref[...])   # (TB, L, 64)
    h = _fused_conv_bn_relu(h, w2_ref[...], t2_ref[...])
    h = _fused_conv_bn_relu(h, w3_ref[...], t3_ref[...])
    # Global average pool over L, batched over the TB samples of this block (one reduce),
    # then one lane-dense (TB, 64) @ (64, 128) MXU matmul for the padded FC.
    pooled = jnp.sum(h, axis=1) * (1.0 / L)                         # (TB, 64)
    logits = jnp.dot(pooled, wfc_ref[...],
                     preferred_element_type=jnp.float32) + bfc_ref[...]
    out_ref[...] = logits.astype(out_ref.dtype)


# ----------------------------------------------------------------------------- param folding

def _fold_conv_bn(w, b, bn, eps=1e-5):
    """PyTorch Conv1d weight (Cout, Cin, 3) + bias (Cout,) + eval BatchNorm -> (3*Cin, Cout), (1, Cout)."""
    gamma, beta, mean, var = bn
    scale = gamma / jnp.sqrt(var + eps)                                     # (Cout,)
    # Tap-major rows so they line up with concat([h_prev, h, h_next], lane axis).
    w_cat = jnp.concatenate([w[:, :, k].T for k in range(3)], axis=0)       # (3*Cin, Cout)
    w_fold = (w_cat * scale[None, :]).astype(jnp.float32)
    t_fold = ((b - mean) * scale + beta)[None, :].astype(jnp.float32)       # (1, Cout)
    return w_fold, t_fold


def fold_params(p, eps=1e-5):
    f = {}
    f["w1"], f["t1"] = _fold_conv_bn(p["conv1_w"], p["conv1_b"], p["bn1"], eps)
    f["w2"], f["t2"] = _fold_conv_bn(p["conv2_w"], p["conv2_b"], p["bn2"], eps)
    f["w3"], f["t3"] = _fold_conv_bn(p["conv3_w"], p["conv3_b"], p["bn3"], eps)
    nc, hidden = p["fc_w"].shape
    nc_pad = _round_up(nc, LANE)
    f["wfc"] = jnp.zeros((hidden, nc_pad), jnp.float32).at[:, :nc].set(p["fc_w"].T)
    f["bfc"] = jnp.zeros((1, nc_pad), jnp.float32).at[0, :nc].set(p["fc_b"])
    return f


# ----------------------------------------------------------------------------- wrapper

def conv1d_model(x_ncl, params, *, tb=128, eps=1e-5):
    """x_ncl: (N, Cin, L) float32 (PyTorch NCL layout). Returns (N, num_classes)."""
    N, Cin, L = x_ncl.shape
    fp = fold_params(params, eps)
    num_classes = params["fc_w"].shape[0]
    nc_pad = fp["wfc"].shape[1]

    # Batch-block size: 128 samples/step by default (TB*L = 2048 MXU rows). For tb=128, L=16 the
    # per-step intermediates are a few MiB of f32 -> comfortably inside the default scoped VMEM
    # on v5e/v6e (32 MiB) and v7x (64 MiB physical), no vmem_limit_bytes override needed.
    tb = min(tb, _round_up(max(N, 1), 8))
    n_pad = _round_up(N, tb)

    x_nlc = jnp.transpose(x_ncl, (0, 2, 1)).astype(jnp.float32)     # (N, L, Cin): channels on lanes
    if n_pad != N:
        x_nlc = jnp.pad(x_nlc, ((0, n_pad - N), (0, 0), (0, 0)))

    def replicated(shape):
        return pl.BlockSpec(shape, lambda i: (0, 0))

    in_specs = [
        pl.BlockSpec((tb, L, Cin), lambda i: (i, 0, 0)),   # batch-tiled input block
        replicated(fp["w1"].shape), replicated(fp["t1"].shape),
        replicated(fp["w2"].shape), replicated(fp["t2"].shape),
        replicated(fp["w3"].shape), replicated(fp["t3"].shape),
        replicated(fp["wfc"].shape), replicated(fp["bfc"].shape),
    ]

    out = pl.pallas_call(
        conv1d_model_kernel,
        out_shape=jax.ShapeDtypeStruct((n_pad, nc_pad), jnp.float32),
        grid_spec=pltpu.PrefetchScalarGridSpec(
            num_scalar_prefetch=0,
            grid=(n_pad // tb,),
            in_specs=in_specs,
            out_specs=pl.BlockSpec((tb, nc_pad), lambda i: (i, 0)),  # lane-dense (TB, 128) store
        ),
        compiler_params=pltpu.CompilerParams(
            dimension_semantics=("parallel",)),
    )(x_nlc, fp["w1"], fp["t1"], fp["w2"], fp["t2"],
      fp["w3"], fp["t3"], fp["wfc"], fp["bfc"])

    return out[:N, :num_classes]


# ----------------------------------------------------------------------------- test harness

def make_params(key, cin, num_classes, hidden=64):
    """Deterministic synthetic parameters in PyTorch layouts (Conv1d: (Cout, Cin, K))."""
    keys = jax.random.split(key, 11)

    def conv(kw, kb, ci, co):
        w = 0.1 * jax.random.normal(kw, (co, ci, 3), jnp.float32)
        b = 0.1 * jax.random.normal(kb, (co,), jnp.float32)
        return w, b

    def bn(k, c):
        kg, kb, km, kv = jax.random.split(k, 4)
        gamma = 1.0 + 0.1 * jax.random.normal(kg, (c,), jnp.float32)
        beta = 0.1 * jax.random.normal(kb, (c,), jnp.float32)
        mean = 0.1 * jax.random.normal(km, (c,), jnp.float32)
        var = jnp.abs(jax.random.normal(kv, (c,), jnp.float32)) + 0.5
        return gamma, beta, mean, var

    p = {}
    p["conv1_w"], p["conv1_b"] = conv(keys[0], keys[1], cin, hidden)
    p["bn1"] = bn(keys[2], hidden)
    p["conv2_w"], p["conv2_b"] = conv(keys[3], keys[4], hidden, hidden)
    p["bn2"] = bn(keys[5], hidden)
    p["conv3_w"], p["conv3_b"] = conv(keys[6], keys[7], hidden, hidden)
    p["bn3"] = bn(keys[8], hidden)
    p["fc_w"] = 0.1 * jax.random.normal(keys[9], (num_classes, hidden), jnp.float32)
    p["fc_b"] = 0.1 * jax.random.normal(keys[10], (num_classes,), jnp.float32)
    return p


def reference_forward(x_ncl, p, eps=1e-5):
    """Pure-JAX reference mirroring the PyTorch forward in eval mode (dropout = identity)."""
    x = jnp.transpose(x_ncl, (0, 2, 1))                      # (N, L, C)

    def conv_bn_relu(h, w, b, bn):
        gamma, beta, mean, var = bn
        zero = jnp.zeros_like(h[:, :1, :])
        h_prev = jnp.concatenate([zero, h[:, :-1, :]], axis=1)
        h_next = jnp.concatenate([h[:, 1:, :], zero], axis=1)
        # PyTorch Conv1d (cross-correlation), padding=1:
        #   y[n,l,d] = b[d] + sum_c (h[l-1,c] w[d,c,0] + h[l,c] w[d,c,1] + h[l+1,c] w[d,c,2])
        y = (jnp.einsum("nlc,dc->nld", h_prev, w[:, :, 0])
             + jnp.einsum("nlc,dc->nld", h, w[:, :, 1])
             + jnp.einsum("nlc,dc->nld", h_next, w[:, :, 2])
             + b[None, None, :])
        scale = gamma / jnp.sqrt(var + eps)
        y = (y - mean[None, None, :]) * scale[None, None, :] + beta[None, None, :]
        return jnp.maximum(y, 0.0)

    h = conv_bn_relu(x, p["conv1_w"], p["conv1_b"], p["bn1"])
    h = conv_bn_relu(h, p["conv2_w"], p["conv2_b"], p["bn2"])
    h = conv_bn_relu(h, p["conv3_w"], p["conv3_b"], p["bn3"])
    pooled = jnp.mean(h, axis=1)                             # AdaptiveAvgPool1d(1)
    return pooled @ p["fc_w"].T + p["fc_b"][None, :]


if __name__ == "__main__":
    N, Cin, L, num_classes = 2, 4, 16, 5
    key = jax.random.PRNGKey(0)
    kx, kp = jax.random.split(key)
    x = jax.random.normal(kx, (N, Cin, L), jnp.float32)      # PyTorch NCL layout
    params = make_params(kp, Cin, num_classes)

    out = conv1d_model(x, params)
    out = jax.block_until_ready(out)

    ref = reference_forward(x, params)
    np.testing.assert_allclose(np.asarray(out), np.asarray(ref), rtol=1e-4, atol=1e-4)
    print("KERNEL_OK")
</pallas_src>

<mosaic_0001>
module attributes {stable_mosaic.version = 11 : i64} {
  func.func @conv1d_model_kernel(%arg0: i32, %arg1: memref<8x16x4xf32, #tpu.memory_space<vmem>>, %arg2: memref<12x64xf32, #tpu.memory_space<vmem>>, %arg3: memref<1x64xf32, #tpu.memory_space<vmem>>, %arg4: memref<192x64xf32, #tpu.memory_space<vmem>>, %arg5: memref<1x64xf32, #tpu.memory_space<vmem>>, %arg6: memref<192x64xf32, #tpu.memory_space<vmem>>, %arg7: memref<1x64xf32, #tpu.memory_space<vmem>>, %arg8: memref<64x128xf32, #tpu.memory_space<vmem>>, %arg9: memref<1x128xf32, #tpu.memory_space<vmem>>, %arg10: memref<8x128xf32, #tpu.memory_space<vmem>>) attributes {dimension_semantics = [#tpu.dimension_semantics<parallel>], iteration_bounds = array<i64: 1>, scalar_prefetch = 0 : i64, scratch_operands = 0 : i64, tpu.core_type = #tpu.core_type<tc>, window_params = [{transform_indices = @transform_0, window_bounds = array<i64: 8, 16, 4>}, {pipeline_mode = #tpu.pipeline_mode<synchronous>, transform_indices = @transform_1, window_bounds = array<i64: 12, 64>}, {pipeline_mode = #tpu.pipeline_mode<synchronous>, transform_indices = @transform_2, window_bounds = array<i64: 1, 64>}, {pipeline_mode = #tpu.pipeline_mode<synchronous>, transform_indices = @transform_3, window_bounds = array<i64: 192, 64>}, {pipeline_mode = #tpu.pipeline_mode<synchronous>, transform_indices = @transform_4, window_bounds = array<i64: 1, 64>}, {pipeline_mode = #tpu.pipeline_mode<synchronous>, transform_indices = @transform_5, window_bounds = array<i64: 192, 64>}, {pipeline_mode = #tpu.pipeline_mode<synchronous>, transform_indices = @transform_6, window_bounds = array<i64: 1, 64>}, {pipeline_mode = #tpu.pipeline_mode<synchronous>, transform_indices = @transform_7, window_bounds = array<i64: 64, 128>}, {pipeline_mode = #tpu.pipeline_mode<synchronous>, transform_indices = @transform_8, window_bounds = array<i64: 1, 128>}, {transform_indices = @transform_9, window_bounds = array<i64: 8, 128>}]} {
    %c0 = arith.constant 0 : index
    %c0_0 = arith.constant 0 : index
    %c0_1 = arith.constant 0 : index
    %0 = vector.load %arg1[%c0, %c0_0, %c0_1] : memref<8x16x4xf32, #tpu.memory_space<vmem>>, vector<8x16x4xf32>
    %c0_2 = arith.constant 0 : index
    %c0_3 = arith.constant 0 : index
    %1 = vector.load %arg2[%c0_2, %c0_3] : memref<12x64xf32, #tpu.memory_space<vmem>>, vector<12x64xf32>
    %c0_4 = arith.constant 0 : index
    %c0_5 = arith.constant 0 : index
    %2 = vector.load %arg3[%c0_4, %c0_5] : memref<1x64xf32, #tpu.memory_space<vmem>>, vector<1x64xf32>
    %cst = arith.constant 0.000000e+00 : f32
    %3 = vector.broadcast %cst : f32 to vector<8x1x4xf32>
    %4 = vector.extract_strided_slice %0 {offsets = [0, 0, 0], sizes = [8, 15, 4], strides = [1, 1, 1]} : vector<8x16x4xf32> to vector<8x15x4xf32>
    %5 = tpu.concatenate %3, %4 in 1 : vector<8x1x4xf32>, vector<8x15x4xf32> -> vector<8x16x4xf32>
    %6 = vector.extract_strided_slice %0 {offsets = [0, 1, 0], sizes = [8, 15, 4], strides = [1, 1, 1]} : vector<8x16x4xf32> to vector<8x15x4xf32>
    %7 = tpu.concatenate %6, %3 in 1 : vector<8x15x4xf32>, vector<8x1x4xf32> -> vector<8x16x4xf32>
    %8 = tpu.concatenate %5, %0, %7 in 2 : vector<8x16x4xf32>, vector<8x16x4xf32>, vector<8x16x4xf32> -> vector<8x16x12xf32>
    %9 = vector.shape_cast %8 : vector<8x16x12xf32> to vector<128x12xf32>
    %cst_6 = arith.constant dense<0.000000e+00> : vector<128x64xf32>
    %10 = tpu.matmul %9, %1, %cst_6 {dimension_numbers = #tpu.dot_dimension_numbers<[1], [0], [0], [1], [0, 0, 1, 1], [], []>} : vector<128x12xf32>, vector<12x64xf32>, vector<128x64xf32> -> vector<128x64xf32>
    %11 = vector.broadcast %2 : vector<1x64xf32> to vector<128x64xf32>
    %12 = arith.addf %10, %11 : vector<128x64xf32>
    %cst_7 = arith.constant 0.000000e+00 : f32
    %13 = vector.broadcast %cst_7 : f32 to vector<128x64xf32>
    %14 = arith.maximumf %12, %13 : vector<128x64xf32>
    %15 = vector.shape_cast %14 : vector<128x64xf32> to vector<8x16x64xf32>
    %c0_8 = arith.constant 0 : index
    %c0_9 = arith.constant 0 : index
    %16 = vector.load %arg4[%c0_8, %c0_9] : memref<192x64xf32, #tpu.memory_space<vmem>>, vector<192x64xf32>
    %c0_10 = arith.constant 0 : index
    %c0_11 = arith.constant 0 : index
    %17 = vector.load %arg5[%c0_10, %c0_11] : memref<1x64xf32, #tpu.memory_space<vmem>>, vector<1x64xf32>
    %cst_12 = arith.constant 0.000000e+00 : f32
    %18 = vector.broadcast %cst_12 : f32 to vector<8x1x64xf32>
    %19 = vector.extract_strided_slice %15 {offsets = [0, 0, 0], sizes = [8, 15, 64], strides = [1, 1, 1]} : vector<8x16x64xf32> to vector<8x15x64xf32>
    %20 = tpu.concatenate %18, %19 in 1 : vector<8x1x64xf32>, vector<8x15x64xf32> -> vector<8x16x64xf32>
    %21 = vector.extract_strided_slice %15 {offsets = [0, 1, 0], sizes = [8, 15, 64], strides = [1, 1, 1]} : vector<8x16x64xf32> to vector<8x15x64xf32>
    %22 = tpu.concatenate %21, %18 in 1 : vector<8x15x64xf32>, vector<8x1x64xf32> -> vector<8x16x64xf32>
    %23 = tpu.concatenate %20, %15, %22 in 2 : vector<8x16x64xf32>, vector<8x16x64xf32>, vector<8x16x64xf32> -> vector<8x16x192xf32>
    %24 = vector.shape_cast %23 : vector<8x16x192xf32> to vector<128x192xf32>
    %cst_13 = arith.constant dense<0.000000e+00> : vector<128x64xf32>
    %25 = tpu.matmul %24, %16, %cst_13 {dimension_numbers = #tpu.dot_dimension_numbers<[1], [0], [0], [1], [0, 0, 1, 1], [], []>} : vector<128x192xf32>, vector<192x64xf32>, vector<128x64xf32> -> vector<128x64xf32>
    %26 = vector.broadcast %17 : vector<1x64xf32> to vector<128x64xf32>
    %27 = arith.addf %25, %26 : vector<128x64xf32>
    %cst_14 = arith.constant 0.000000e+00 : f32
    %28 = vector.broadcast %cst_14 : f32 to vector<128x64xf32>
    %29 = arith.maximumf %27, %28 : vector<128x64xf32>
    %30 = vector.shape_cast %29 : vector<128x64xf32> to vector<8x16x64xf32>
    %c0_15 = arith.constant 0 : index
    %c0_16 = arith.constant 0 : index
    %31 = vector.load %arg6[%c0_15, %c0_16] : memref<192x64xf32, #tpu.memory_space<vmem>>, vector<192x64xf32>
    %c0_17 = arith.constant 0 : index
    %c0_18 = arith.constant 0 : index
    %32 = vector.load %arg7[%c0_17, %c0_18] : memref<1x64xf32, #tpu.memory_space<vmem>>, vector<1x64xf32>
    %cst_19 = arith.constant 0.000000e+00 : f32
    %33 = vector.broadcast %cst_19 : f32 to vector<8x1x64xf32>
    %34 = vector.extract_strided_slice %30 {offsets = [0, 0, 0], sizes = [8, 15, 64], strides = [1, 1, 1]} : vector<8x16x64xf32> to vector<8x15x64xf32>
    %35 = tpu.concatenate %33, %34 in 1 : vector<8x1x64xf32>, vector<8x15x64xf32> -> vector<8x16x64xf32>
    %36 = vector.extract_strided_slice %30 {offsets = [0, 1, 0], sizes = [8, 15, 64], strides = [1, 1, 1]} : vector<8x16x64xf32> to vector<8x15x64xf32>
    %37 = tpu.concatenate %36, %33 in 1 : vector<8x15x64xf32>, vector<8x1x64xf32> -> vector<8x16x64xf32>
    %38 = tpu.concatenate %35, %30, %37 in 2 : vector<8x16x64xf32>, vector<8x16x64xf32>, vector<8x16x64xf32> -> vector<8x16x192xf32>
    %39 = vector.shape_cast %38 : vector<8x16x192xf32> to vector<128x192xf32>
    %cst_20 = arith.constant dense<0.000000e+00> : vector<128x64xf32>
    %40 = tpu.matmul %39, %31, %cst_20 {dimension_numbers = #tpu.dot_dimension_numbers<[1], [0], [0], [1], [0, 0, 1, 1], [], []>} : vector<128x192xf32>, vector<192x64xf32>, vector<128x64xf32> -> vector<128x64xf32>
    %41 = vector.broadcast %32 : vector<1x64xf32> to vector<128x64xf32>
    %42 = arith.addf %40, %41 : vector<128x64xf32>
    %cst_21 = arith.constant 0.000000e+00 : f32
    %43 = vector.broadcast %cst_21 : f32 to vector<128x64xf32>
    %44 = arith.maximumf %42, %43 : vector<128x64xf32>
    %45 = vector.shape_cast %44 : vector<128x64xf32> to vector<8x16x64xf32>
    %cst_22 = arith.constant dense<0.000000e+00> : vector<8x64xf32>
    %46 = vector.multi_reduction <add>, %45, %cst_22 [1] : vector<8x16x64xf32> to vector<8x64xf32>
    %cst_23 = arith.constant 6.250000e-02 : f32
    %47 = vector.broadcast %cst_23 : f32 to vector<8x64xf32>
    %48 = arith.mulf %46, %47 : vector<8x64xf32>
    %c0_24 = arith.constant 0 : index
    %c0_25 = arith.constant 0 : index
    %49 = vector.load %arg8[%c0_24, %c0_25] : memref<64x128xf32, #tpu.memory_space<vmem>>, vector<64x128xf32>
    %cst_26 = arith.constant dense<0.000000e+00> : vector<8x128xf32>
    %50 = tpu.matmul %48, %49, %cst_26 {dimension_numbers = #tpu.dot_dimension_numbers<[1], [0], [0], [1], [0, 0, 1, 1], [], []>} : vector<8x64xf32>, vector<64x128xf32>, vector<8x128xf32> -> vector<8x128xf32>
    %c0_27 = arith.constant 0 : index
    %c0_28 = arith.constant 0 : index
    %51 = vector.load %arg9[%c0_27, %c0_28] : memref<1x128xf32, #tpu.memory_space<vmem>>, vector<1x128xf32>
    %52 = vector.broadcast %51 : vector<1x128xf32> to vector<8x128xf32>
    %53 = arith.addf %50, %52 : vector<8x128xf32>
    %c0_29 = arith.constant 0 : index
    %c0_30 = arith.constant 0 : index
    %54 = vector.load %arg10[%c0_29, %c0_30] : memref<8x128xf32, #tpu.memory_space<vmem>>, vector<8x128xf32>
    tpu.vector_store %arg10[%c0_29, %c0_30], %53 {strides = array<i32>} : memref<8x128xf32, #tpu.memory_space<vmem>>, vector<8x128xf32>,
    return
  }
  func.func @transform_0(%arg0: i32) -> (i32, i32, i32) {
    %c0_i32 = arith.constant 0 : i32
    %c0_i32_0 = arith.constant 0 : i32
    %c0_i32_1 = arith.constant 0 : i32
    return %arg0, %c0_i32, %c0_i32_0 : i32, i32, i32
  }
  func.func @transform_1(%arg0: i32) -> (i32, i32) {
    %c0_i32 = arith.constant 0 : i32
    %c0_i32_0 = arith.constant 0 : i32
    %c0_i32_1 = arith.constant 0 : i32
    return %c0_i32, %c0_i32_0 : i32, i32
  }
  func.func @transform_2(%arg0: i32) -> (i32, i32) {
    %c0_i32 = arith.constant 0 : i32
    %c0_i32_0 = arith.constant 0 : i32
    %c0_i32_1 = arith.constant 0 : i32
    return %c0_i32, %c0_i32_0 : i32, i32
  }
  func.func @transform_3(%arg0: i32) -> (i32, i32) {
    %c0_i32 = arith.constant 0 : i32
    %c0_i32_0 = arith.constant 0 : i32
    %c0_i32_1 = arith.constant 0 : i32
    return %c0_i32, %c0_i32_0 : i32, i32
  }
  func.func @transform_4(%arg0: i32) -> (i32, i32) {
    %c0_i32 = arith.constant 0 : i32
    %c0_i32_0 = arith.constant 0 : i32
    %c0_i32_1 = arith.constant 0 : i32
    return %c0_i32, %c0_i32_0 : i32, i32
  }
  func.func @transform_5(%arg0: i32) -> (i32, i32) {
    %c0_i32 = arith.constant 0 : i32
    %c0_i32_0 = arith.constant 0 : i32
    %c0_i32_1 = arith.constant 0 : i32
    return %c0_i32, %c0_i32_0 : i32, i32
  }
  func.func @transform_6(%arg0: i32) -> (i32, i32) {
    %c0_i32 = arith.constant 0 : i32
    %c0_i32_0 = arith.constant 0 : i32
    %c0_i32_1 = arith.constant 0 : i32
    return %c0_i32, %c0_i32_0 : i32, i32
  }
  func.func @transform_7(%arg0: i32) -> (i32, i32) {
    %c0_i32 = arith.constant 0 : i32
    %c0_i32_0 = arith.constant 0 : i32
    %c0_i32_1 = arith.constant 0 : i32
    return %c0_i32, %c0_i32_0 : i32, i32
  }
  func.func @transform_8(%arg0: i32) -> (i32, i32) {
    %c0_i32 = arith.constant 0 : i32
    %c0_i32_0 = arith.constant 0 : i32
    %c0_i32_1 = arith.constant 0 : i32
    return %c0_i32, %c0_i32_0 : i32, i32
  }
  func.func @transform_9(%arg0: i32) -> (i32, i32) {
    %c0_i32 = arith.constant 0 : i32
    %c0_i32_0 = arith.constant 0 : i32
    return %arg0, %c0_i32 : i32, i32
  }
}

</mosaic_0001>

<llo_original>
// kernel: tpu_custom_call.1
$region0: #{tpu_custom_call.1}
  #allocation0 [shape = 'u32[]', space=smem, size = 0x4, offset = 0x4, fixed_abs, tag = 'smem constant byte address 0x4 - core index']
  #allocation1 [shape = 'u32[72,128]{1,0:T(1,128)}', space=vmem, size = 0x9000, scoped, tag = 'internal scratch']
  %s0 = inlined_call_operand.vmem [shape: f32[8,16,4], index: 0, kind: input, shape index: {}]
  %s1 = inlined_call_operand.vmem [shape: f32[12,64], index: 1, kind: input, shape index: {}]
  %s2 = inlined_call_operand.vmem [shape: f32[1,64], index: 2, kind: input, shape index: {}]
  %s3 = inlined_call_operand.vmem [shape: f32[192,64], index: 3, kind: input, shape index: {}]
  %s4 = inlined_call_operand.vmem [shape: f32[1,64], index: 4, kind: input, shape index: {}]
  %s5 = inlined_call_operand.vmem [shape: f32[192,64], index: 5, kind: input, shape index: {}]
  %s6 = inlined_call_operand.vmem [shape: f32[1,64], index: 6, kind: input, shape index: {}]
  %s7 = inlined_call_operand.vmem [shape: f32[64,128], index: 7, kind: input, shape index: {}]
  %s8 = inlined_call_operand.vmem [shape: f32[1,128], index: 8, kind: input, shape index: {}]
  %s9 = inlined_call_operand.hbm [shape: f32[8,128], index: 9, kind: output, shape index: {}]
  %s10 = sld [smem:[#allocation0]]
  $region46: #{tpu_custom_call.1} parent=0
    _
  %s12 = ssub.s32 1, %s10
  %s13 = scalar_select 0, %s12, %s10
  $region1: #{tpu_custom_call.1} parent=0
    #allocation2 [shape = 'u8[4096]{0}', space=vmem, size = 0x1000, scoped, tag = 'output window, operand 0, single buffered']
    #allocation3 [shape = 's32[1]{0}', space=sflag, size = 0x4, scoped, tag = 'scoped memory for tpu_custom_call.1']
    %14 = vsyncpa [#allocation3], 0
    // Predicated region
    $region2: #{tpu_custom_call.1} parent=1 // pred_check
      _
    $region3: #{tpu_custom_call.1} parent=1 // pred_check_branch
      %16 = sbr.rel (0) target = $region5
    $region4: #{tpu_custom_call.1} parent=1 // pred_region
      _
    $region5: #{tpu_custom_call.1} parent=1 // pred_fallthru
      _
    // Predicated region
    $region6: #{tpu_custom_call.1} parent=1 // pred_check
      _
    $region7: #{tpu_custom_call.1} parent=1 // pred_check_branch
      %18 = sbr.rel (0) target = $region9
    $region8: #{tpu_custom_call.1} parent=1 // pred_region
      _
    $region9: #{tpu_custom_call.1} parent=1 // pred_fallthru
      _
    // Predicated region
    $region10: #{tpu_custom_call.1} parent=1 // pred_check
      _
    $region11: #{tpu_custom_call.1} parent=1 // pred_check_branch
      %20 = sbr.rel (0) target = $region13
    $region12: #{tpu_custom_call.1} parent=1 // pred_region
      _
    $region13: #{tpu_custom_call.1} parent=1 // pred_fallthru
      _
    // Predicated region
    $region14: #{tpu_custom_call.1} parent=1 // pred_check
      _
    $region15: #{tpu_custom_call.1} parent=1 // pred_check_branch
      %22 = sbr.rel (0) target = $region17
    $region16: #{tpu_custom_call.1} parent=1 // pred_region
      _
    $region17: #{tpu_custom_call.1} parent=1 // pred_fallthru
      _
    // Predicated region
    $region18: #{tpu_custom_call.1} parent=1 // pred_check
      _
    $region19: #{tpu_custom_call.1} parent=1 // pred_check_branch
      %24 = sbr.rel (0) target = $region21
    $region20: #{tpu_custom_call.1} parent=1 // pred_region
      _
    $region21: #{tpu_custom_call.1} parent=1 // pred_fallthru
      _
    // Predicated region
    $region22: #{tpu_custom_call.1} parent=1 // pred_check
      _
    $region23: #{tpu_custom_call.1} parent=1 // pred_check_branch
      %26 = sbr.rel (0) target = $region25
    $region24: #{tpu_custom_call.1} parent=1 // pred_region
      _
    $region25: #{tpu_custom_call.1} parent=1 // pred_fallthru
      _
    // Predicated region
    $region26: #{tpu_custom_call.1} parent=1 // pred_check
      _
    $region27: #{tpu_custom_call.1} parent=1 // pred_check_branch
      %28 = sbr.rel (0) target = $region29
    $region28: #{tpu_custom_call.1} parent=1 // pred_region
      _
    $region29: #{tpu_custom_call.1} parent=1 // pred_fallthru
      _
    // Predicated region
    $region30: #{tpu_custom_call.1} parent=1 // pred_check
      _
    $region31: #{tpu_custom_call.1} parent=1 // pred_check_branch
      %30 = sbr.rel (0) target = $region33
    $region32: #{tpu_custom_call.1} parent=1 // pred_region
      _
    $region33: #{tpu_custom_call.1} parent=1 // pred_fallthru
      _
    // Predicated region
    $region34: #{tpu_custom_call.1} parent=1 // pred_check
      _
    $region35: #{tpu_custom_call.1} parent=1 // pred_check_branch
      %32 = sbr.rel (0) target = $region37
    $region36: #{tpu_custom_call.1} parent=1 // pred_region
      _
    $region37: #{tpu_custom_call.1} parent=1 // pred_fallthru
      _
    %v33 = vld [vmem:[%s0] sm:$0xff]
    %v34 = vld [vmem:[%s0 + $0x8] sm:$0xff]
    %v35 = vld [vmem:[%s0 + $0x10] sm:$0xff]
    %v36 = vld [vmem:[%s0 + $0x18] sm:$0xff]
    %v37 = vld [vmem:[%s0 + $0x20] sm:$0xff]
    %v38 = vld [vmem:[%s0 + $0x28] sm:$0xff]
    %v39 = vld [vmem:[%s0 + $0x30] sm:$0xff]
    %v40 = vld [vmem:[%s0 + $0x38] sm:$0xff]
    %v41 = vld [vmem:[%s0 + $0x40] sm:$0xff]
    %v42 = vld [vmem:[%s0 + $0x48] sm:$0xff]
    %v43 = vld [vmem:[%s0 + $0x50] sm:$0xff]
    %v44 = vld [vmem:[%s0 + $0x58] sm:$0xff]
    %v45 = vld [vmem:[%s0 + $0x60] sm:$0xff]
    %v46 = vld [vmem:[%s0 + $0x68] sm:$0xff]
    %v47 = vld [vmem:[%s0 + $0x70] sm:$0xff]
    %v48 = vld [vmem:[%s0 + $0x78] sm:$0xff]
    %v49 = vld [vmem:[%s1] sm:$0xff]
    %v50 = vld [vmem:[%s1 + $0x8] sm:$0xf]
    %v51 = vld [vmem:[%s2] sm:$0x1]
    %vm68 = vcmask 1040384
    %v69 = vrot.slane %v33, 7
    %v70 = vrot.slane %v34, 7
    %v71 = vsel %vm68, %v69, %v70
    %v72 = vrot.slane %v35, 7
    %v73 = vrot.slane %v36, 7
    %v74 = vsel %vm68, %v72, %v73
    %v75 = vrot.slane %v37, 7
    %v76 = vrot.slane %v38, 7
    %v77 = vsel %vm68, %v75, %v76
    %v78 = vrot.slane %v39, 7
    %v79 = vrot.slane %v40, 7
    %v80 = vsel %vm68, %v78, %v79
    %v81 = vrot.slane %v41, 7
    %v82 = vrot.slane %v42, 7
    %v83 = vsel %vm68, %v81, %v82
    %v84 = vrot.slane %v43, 7
    %v85 = vrot.slane %v44, 7
    %v86 = vsel %vm68, %v84, %v85
    %v87 = vrot.slane %v45, 7
    %v88 = vrot.slane %v46, 7
    %v89 = vsel %vm68, %v87, %v88
    %v90 = vrot.slane %v47, 7
    %v91 = vrot.slane %v48, 7
    %v92 = vsel %vm68, %v90, %v91
    %v109 = vsel %vm68, 0.0, %v69
    %v110 = vsel %vm68, 0.0, %v72
    %v111 = vsel %vm68, 0.0, %v75
    %v112 = vsel %vm68, 0.0, %v78
    %v113 = vsel %vm68, 0.0, %v81
    %v114 = vsel %vm68, 0.0, %v84
    %v115 = vsel %vm68, 0.0, %v87
    %v116 = vsel %vm68, 0.0, %v90
    %vm117 = vcmask 1046528
    %v118 = vrot.slane %v33, 1
    %v119 = vrot.slane %v34, 1
    %v120 = vsel %vm117, %v118, %v119
    %v121 = vrot.slane %v35, 1
    %v122 = vrot.slane %v36, 1
    %v123 = vsel %vm117, %v121, %v122
    %v124 = vrot.slane %v37, 1
    %v125 = vrot.slane %v38, 1
    %v126 = vsel %vm117, %v124, %v125
    %v127 = vrot.slane %v39, 1
    %v128 = vrot.slane %v40, 1
    %v129 = vsel %vm117, %v127, %v128
    %v130 = vrot.slane %v41, 1
    %v131 = vrot.slane %v42, 1
    %v132 = vsel %vm117, %v130, %v131
    %v133 = vrot.slane %v43, 1
    %v134 = vrot.slane %v44, 1
    %v135 = vsel %vm117, %v133, %v134
    %v136 = vrot.slane %v45, 1
    %v137 = vrot.slane %v46, 1
    %v138 = vsel %vm117, %v136, %v137
    %v139 = vrot.slane %v47, 1
    %v140 = vrot.slane %v48, 1
    %v141 = vsel %vm117, %v139, %v140
    %v150 = vsel %vm117, %v119, 0.0
    %v151 = vsel %vm117, %v122, 0.0
    %v152 = vsel %vm117, %v125, 0.0
    %v153 = vsel %vm117, %v128, 0.0
    %v154 = vsel %vm117, %v131, 0.0
    %v155 = vsel %vm117, %v134, 0.0
    %v156 = vsel %vm117, %v137, 0.0
    %v157 = vsel %vm117, %v140, 0.0
    %158 = vrot.lane.b32.xlu0 %v33, 4
    %v159 = vpop.permute.xlu0 %158
    %160 = vrot.lane.b32.xlu0 %v34, 4
    %v161 = vpop.permute.xlu0 %160
    %162 = vrot.lane.b32.xlu0 %v35, 4
    %v163 = vpop.permute.xlu0 %162
    %164 = vrot.lane.b32.xlu0 %v36, 4
    %v165 = vpop.permute.xlu0 %164
    %166 = vrot.lane.b32.xlu0 %v37, 4
    %v167 = vpop.permute.xlu0 %166
    %168 = vrot.lane.b32.xlu0 %v38, 4
    %v169 = vpop.permute.xlu0 %168
    %170 = vrot.lane.b32.xlu0 %v39, 4
    %v171 = vpop.permute.xlu0 %170
    %172 = vrot.lane.b32.xlu0 %v40, 4
    %v173 = vpop.permute.xlu0 %172
    %174 = vrot.lane.b32.xlu0 %v41, 4
    %v175 = vpop.permute.xlu0 %174
    %176 = vrot.lane.b32.xlu0 %v42, 4
    %v177 = vpop.permute.xlu0 %176
    %178 = vrot.lane.b32.xlu0 %v43, 4
    %v179 = vpop.permute.xlu0 %178
    %180 = vrot.lane.b32.xlu0 %v44, 4
    %v181 = vpop.permute.xlu0 %180
    %182 = vrot.lane.b32.xlu0 %v45, 4
    %v183 = vpop.permute.xlu0 %182
    %184 = vrot.lane.b32.xlu0 %v46, 4
    %v185 = vpop.permute.xlu0 %184
    %186 = vrot.lane.b32.xlu0 %v47, 4
    %v187 = vpop.permute.xlu0 %186
    %188 = vrot.lane.b32.xlu0 %v48, 4
    %v189 = vpop.permute.xlu0 %188
    %214 = vrot.lane.b32.xlu0 %v120, 8
    %v215 = vpop.permute.xlu0 %214
    %216 = vrot.lane.b32.xlu0 %v150, 8
    %v217 = vpop.permute.xlu0 %216
    %218 = vrot.lane.b32.xlu0 %v123, 8
    %v219 = vpop.permute.xlu0 %218
    %220 = vrot.lane.b32.xlu0 %v151, 8
    %v221 = vpop.permute.xlu0 %220
    %222 = vrot.lane.b32.xlu0 %v126, 8
    %v223 = vpop.permute.xlu0 %222
    %224 = vrot.lane.b32.xlu0 %v152, 8
    %v225 = vpop.permute.xlu0 %224
    %226 = vrot.lane.b32.xlu0 %v129, 8
    %v227 = vpop.permute.xlu0 %226
    %228 = vrot.lane.b32.xlu0 %v153, 8
    %v229 = vpop.permute.xlu0 %228
    %230 = vrot.lane.b32.xlu0 %v132, 8
    %v231 = vpop.permute.xlu0 %230
    %232 = vrot.lane.b32.xlu0 %v154, 8
    %v233 = vpop.permute.xlu0 %232
    %234 = vrot.lane.b32.xlu0 %v135, 8
    %v235 = vpop.permute.xlu0 %234
    %236 = vrot.lane.b32.xlu0 %v155, 8
    %v237 = vpop.permute.xlu0 %236
    %238 = vrot.lane.b32.xlu0 %v138, 8
    %v239 = vpop.permute.xlu0 %238
    %240 = vrot.lane.b32.xlu0 %v156, 8
    %v241 = vpop.permute.xlu0 %240
    %242 = vrot.lane.b32.xlu0 %v141, 8
    %v243 = vpop.permute.xlu0 %242
    %244 = vrot.lane.b32.xlu0 %v157, 8
    %v245 = vpop.permute.xlu0 %244
    %vm262 = vcmask 31744
    %v263 = vsel %vm262, %v109, %v159
    %v264 = vsel %vm262, %v71, %v161
    %v265 = vsel %vm262, %v110, %v163
    %v266 = vsel %vm262, %v74, %v165
    %v267 = vsel %vm262, %v111, %v167
    %v268 = vsel %vm262, %v77, %v169
    %v269 = vsel %vm262, %v112, %v171
    %v270 = vsel %vm262, %v80, %v173
    %v271 = vsel %vm262, %v113, %v175
    %v272 = vsel %vm262, %v83, %v177
    %v273 = vsel %vm262, %v114, %v179
    %v274 = vsel %vm262, %v86, %v181
    %v275 = vsel %vm262, %v115, %v183
    %v276 = vsel %vm262, %v89, %v185
    %v277 = vsel %vm262, %v116, %v187
    %v278 = vsel %vm262, %v92, %v189
    %vm279 = vcmask 64512
    %v280 = vsel %vm279, %v263, %v215
    %v281 = vsel %vm279, %v264, %v217
    %v282 = vsel %vm279, %v265, %v219
    %v283 = vsel %vm279, %v266, %v221
    %v284 = vsel %vm279, %v267, %v223
    %v285 = vsel %vm279, %v268, %v225
    %v286 = vsel %vm279, %v269, %v227
    %v287 = vsel %vm279, %v270, %v229
    %v288 = vsel %vm279, %v271, %v231
    %v289 = vsel %vm279, %v272, %v233
    %v290 = vsel %vm279, %v273, %v235
    %v291 = vsel %vm279, %v274, %v237
    %v292 = vsel %vm279, %v275, %v239
    %v293 = vsel %vm279, %v276, %v241
    %v294 = vsel %vm279, %v277, %v243
    %v295 = vsel %vm279, %v278, %v245
    %v297 = vperm.slane %v51, 0
    %vm299 = vcmask 97280
    %v301 = vsel %vm299, %v280, 0
    %v304 = vsel %vm299, %v281, 0
    %v307 = vsel %vm299, %v282, 0
    %v310 = vsel %vm299, %v283, 0
    %v313 = vsel %vm299, %v284, 0
    %v316 = vsel %vm299, %v285, 0
    %v319 = vsel %vm299, %v286, 0
    %v322 = vsel %vm299, %v287, 0
    %v325 = vsel %vm299, %v288, 0
    %v328 = vsel %vm299, %v289, 0
    %v331 = vsel %vm299, %v290, 0
    %v334 = vsel %vm299, %v291, 0
    %v337 = vsel %vm299, %v292, 0
    %v340 = vsel %vm299, %v293, 0
    %v343 = vsel %vm299, %v294, 0
    %v346 = vsel %vm299, %v295, 0
    %vm348 = vcmask 1043456
    %v350 = vsel %vm348, %v50, 0
    %352 = vmatpush.msra.mxu0 0.0
    %353 = vmatpush.msra.mxu0 0.0
    %354 = vmatpush.msra.mxu0 0.0
    %355 = vmatpush.msra.mxu0 0.0
    %356 = vmatpush.msra.mxu0 0.0
    %357 = vmatpush.msra.mxu0 0.0
    %358 = vmatpush.msra.mxu0 0.0
    %359 = vmatpush.msra.mxu0 0.0
    %360 = vmatpush.msra.mxu0 0.0
    %361 = vmatpush.msra.mxu0 0.0
    %362 = vmatpush.msra.mxu0 0.0
    %363 = vmatpush.msra.mxu0 0.0
    %364 = vmatpush.msra.mxu0 0.0
    %365 = vmatpush.msra.mxu0 0.0
    %366 = vmatpush.msra.mxu0 %v350
    %367 = vmatpush.msra.mxu0 %v49
    %368 = vmatmul.f32.gmra.mxu0 %v301
    %v369 = vpop.f32.mrf.mxu0
    %v370 = vadd.f32 %v297, %v369
    %371 = vmatmul.f32.gmra.mxu0 %v304
    %v372 = vpop.f32.mrf.mxu0
    %v373 = vadd.f32 %v297, %v372
    %374 = vmatmul.f32.gmra.mxu0 %v307
    %v375 = vpop.f32.mrf.mxu0
    %v376 = vadd.f32 %v297, %v375
    %377 = vmatmul.f32.gmra.mxu0 %v310
    %v378 = vpop.f32.mrf.mxu0
    %v379 = vadd.f32 %v297, %v378
    %380 = vmatmul.f32.gmra.mxu0 %v313
    %v381 = vpop.f32.mrf.mxu0
    %v382 = vadd.f32 %v297, %v381
    %383 = vmatmul.f32.gmra.mxu0 %v316
    %v384 = vpop.f32.mrf.mxu0
    %v385 = vadd.f32 %v297, %v384
    %386 = vmatmul.f32.gmra.mxu0 %v319
    %v387 = vpop.f32.mrf.mxu0
    %v388 = vadd.f32 %v297, %v387
    %389 = vmatmul.f32.gmra.mxu0 %v322
    %v390 = vpop.f32.mrf.mxu0
    %v391 = vadd.f32 %v297, %v390
    %392 = vmatmul.f32.gmra.mxu0 %v325
    %v393 = vpop.f32.mrf.mxu0
    %v394 = vadd.f32 %v297, %v393
    %395 = vmatmul.f32.gmra.mxu0 %v328
    %v396 = vpop.f32.mrf.mxu0
    %v397 = vadd.f32 %v297, %v396
    %398 = vmatmul.f32.gmra.mxu0 %v331
    %v399 = vpop.f32.mrf.mxu0
    %v400 = vadd.f32 %v297, %v399
    %401 = vmatmul.f32.gmra.mxu0 %v334
    %v402 = vpop.f32.mrf.mxu0
    %v403 = vadd.f32 %v297, %v402
    %404 = vmatmul.f32.gmra.mxu0 %v337
    %v405 = vpop.f32.mrf.mxu0
    %v406 = vadd.f32 %v297, %v405
    %407 = vmatmul.f32.gmra.mxu0 %v340
    %v408 = vpop.f32.mrf.mxu0
    %v409 = vadd.f32 %v297, %v408
    %410 = vmatmul.f32.gmra.mxu0 %v343
    %v411 = vpop.f32.mrf.mxu0
    %v412 = vadd.f32 %v297, %v411
    %413 = vmatmul.f32.gmra.mxu0 %v346
    %v414 = vpop.f32.mrf.mxu0
    %v415 = vadd.f32 %v297, %v414
    %416 = vdwg.mxu0
    %v417 = vmax.f32 %v370, 0.0
    %v418 = vmax.f32 %v373, 0.0
    %v419 = vmax.f32 %v376, 0.0
    %v420 = vmax.f32 %v379, 0.0
    %v421 = vmax.f32 %v382, 0.0
    %v422 = vmax.f32 %v385, 0.0
    %v423 = vmax.f32 %v388, 0.0
    %v424 = vmax.f32 %v391, 0.0
    %v425 = vmax.f32 %v394, 0.0
    %v426 = vmax.f32 %v397, 0.0
    %v427 = vmax.f32 %v400, 0.0
    %v428 = vmax.f32 %v403, 0.0
    %v429 = vmax.f32 %v406, 0.0
    %v430 = vmax.f32 %v409, 0.0
    %v431 = vmax.f32 %v412, 0.0
    %v432 = vmax.f32 %v415, 0.0
    %v433 = vld [vmem:[%s3] sm:$0xff]
    %v434 = vld [vmem:[%s3 + $0x8] sm:$0xff]
    %v435 = vld [vmem:[%s3 + $0x10] sm:$0xff]
    %v436 = vld [vmem:[%s3 + $0x18] sm:$0xff]
    %v437 = vld [vmem:[%s3 + $0x20] sm:$0xff]
    %v438 = vld [vmem:[%s3 + $0x28] sm:$0xff]
    %v439 = vld [vmem:[%s3 + $0x30] sm:$0xff]
    %v440 = vld [vmem:[%s3 + $0x38] sm:$0xff]
    %v441 = vld [vmem:[%s3 + $0x40] sm:$0xff]
    %v442 = vld [vmem:[%s3 + $0x48] sm:$0xff]
    %v443 = vld [vmem:[%s3 + $0x50] sm:$0xff]
    %v444 = vld [vmem:[%s3 + $0x58] sm:$0xff]
    %v445 = vld [vmem:[%s3 + $0x60] sm:$0xff]
    %v446 = vld [vmem:[%s3 + $0x68] sm:$0xff]
    %v447 = vld [vmem:[%s3 + $0x70] sm:$0xff]
    %v448 = vld [vmem:[%s3 + $0x78] sm:$0xff]
    %v449 = vld [vmem:[%s3 + $0x80] sm:$0xff]
    %v450 = vld [vmem:[%s3 + $0x88] sm:$0xff]
    %v451 = vld [vmem:[%s3 + $0x90] sm:$0xff]
    %v452 = vld [vmem:[%s3 + $0x98] sm:$0xff]
    %v453 = vld [vmem:[%s3 + $0xa0] sm:$0xff]
    %v454 = vld [vmem:[%s3 + $0xa8] sm:$0xff]
    %v455 = vld [vmem:[%s3 + $0xb0] sm:$0xff]
    %v456 = vld [vmem:[%s3 + $0xb8] sm:$0xff]
    %v457 = vld [vmem:[%s4] sm:$0x1]
    %v474 = vrot.slane %v417, 7
    %v475 = vrot.slane %v418, 7
    %v476 = vsel %vm68, %v474, %v475
    %v477 = vrot.slane %v419, 7
    %v478 = vrot.slane %v420, 7
    %v479 = vsel %vm68, %v477, %v478
    %v480 = vrot.slane %v421, 7
    %v481 = vrot.slane %v422, 7
    %v482 = vsel %vm68, %v480, %v481
    %v483 = vrot.slane %v423, 7
    %v484 = vrot.slane %v424, 7
    %v485 = vsel %vm68, %v483, %v484
    %v486 = vrot.slane %v425, 7
    %v487 = vrot.slane %v426, 7
    %v488 = vsel %vm68, %v486, %v487
    %v489 = vrot.slane %v427, 7
    %v490 = vrot.slane %v428, 7
    %v491 = vsel %vm68, %v489, %v490
    %v492 = vrot.slane %v429, 7
    %v493 = vrot.slane %v430, 7
    %v494 = vsel %vm68, %v492, %v493
    %v495 = vrot.slane %v431, 7
    %v496 = vrot.slane %v432, 7
    %v497 = vsel %vm68, %v495, %v496
    %v514 = vsel %vm68, 0.0, %v474
    %v515 = vsel %vm68, 0.0, %v477
    %v516 = vsel %vm68, 0.0, %v480
    %v517 = vsel %vm68, 0.0, %v483
    %v518 = vsel %vm68, 0.0, %v486
    %v519 = vsel %vm68, 0.0, %v489
    %v520 = vsel %vm68, 0.0, %v492
    %v521 = vsel %vm68, 0.0, %v495
    %v522 = vrot.slane %v417, 1
    %v523 = vrot.slane %v418, 1
    %v524 = vsel %vm117, %v522, %v523
    %v525 = vrot.slane %v419, 1
    %v526 = vrot.slane %v420, 1
    %v527 = vsel %vm117, %v525, %v526
    %v528 = vrot.slane %v421, 1
    %v529 = vrot.slane %v422, 1
    %v530 = vsel %vm117, %v528, %v529
    %v531 = vrot.slane %v423, 1
    %v532 = vrot.slane %v424, 1
    %v533 = vsel %vm117, %v531, %v532
    %v534 = vrot.slane %v425, 1
    %v535 = vrot.slane %v426, 1
    %v536 = vsel %vm117, %v534, %v535
    %v537 = vrot.slane %v427, 1
    %v538 = vrot.slane %v428, 1
    %v539 = vsel %vm117, %v537, %v538
    %v540 = vrot.slane %v429, 1
    %v541 = vrot.slane %v430, 1
    %v542 = vsel %vm117, %v540, %v541
    %v543 = vrot.slane %v431, 1
    %v544 = vrot.slane %v432, 1
    %v545 = vsel %vm117, %v543, %v544
    %v554 = vsel %vm117, %v523, 0.0
    %v555 = vsel %vm117, %v526, 0.0
    %v556 = vsel %vm117, %v529, 0.0
    %v557 = vsel %vm117, %v532, 0.0
    %v558 = vsel %vm117, %v535, 0.0
    %v559 = vsel %vm117, %v538, 0.0
    %v560 = vsel %vm117, %v541, 0.0
    %v561 = vsel %vm117, %v544, 0.0
    %562 = vrot.lane.b32.xlu0 %v417, 64
    %v563 = vpop.permute.xlu0 %562
    %564 = vrot.lane.b32.xlu0 %v418, 64
    %v565 = vpop.permute.xlu0 %564
    %566 = vrot.lane.b32.xlu0 %v419, 64
    %v567 = vpop.permute.xlu0 %566
    %568 = vrot.lane.b32.xlu0 %v420, 64
    %v569 = vpop.permute.xlu0 %568
    %570 = vrot.lane.b32.xlu0 %v421, 64
    %v571 = vpop.permute.xlu0 %570
    %572 = vrot.lane.b32.xlu0 %v422, 64
    %v573 = vpop.permute.xlu0 %572
    %574 = vrot.lane.b32.xlu0 %v423, 64
    %v575 = vpop.permute.xlu0 %574
    %576 = vrot.lane.b32.xlu0 %v424, 64
    %v577 = vpop.permute.xlu0 %576
    %578 = vrot.lane.b32.xlu0 %v425, 64
    %v579 = vpop.permute.xlu0 %578
    %580 = vrot.lane.b32.xlu0 %v426, 64
    %v581 = vpop.permute.xlu0 %580
    %582 = vrot.lane.b32.xlu0 %v427, 64
    %v583 = vpop.permute.xlu0 %582
    %584 = vrot.lane.b32.xlu0 %v428, 64
    %v585 = vpop.permute.xlu0 %584
    %586 = vrot.lane.b32.xlu0 %v429, 64
    %v587 = vpop.permute.xlu0 %586
    %588 = vrot.lane.b32.xlu0 %v430, 64
    %v589 = vpop.permute.xlu0 %588
    %590 = vrot.lane.b32.xlu0 %v431, 64
    %v591 = vpop.permute.xlu0 %590
    %592 = vrot.lane.b32.xlu0 %v432, 64
    %v593 = vpop.permute.xlu0 %592
    %vm610 = vcmask 523264
    %v611 = vsel %vm610, %v514, %v563
    %v612 = vsel %vm610, %v476, %v565
    %v613 = vsel %vm610, %v515, %v567
    %v614 = vsel %vm610, %v479, %v569
    %v615 = vsel %vm610, %v516, %v571
    %v616 = vsel %vm610, %v482, %v573
    %v617 = vsel %vm610, %v517, %v575
    %v618 = vsel %vm610, %v485, %v577
    %v619 = vsel %vm610, %v518, %v579
    %v620 = vsel %vm610, %v488, %v581
    %v621 = vsel %vm610, %v519, %v583
    %v622 = vsel %vm610, %v491, %v585
    %v623 = vsel %vm610, %v520, %v587
    %v624 = vsel %vm610, %v494, %v589
    %v625 = vsel %vm610, %v521, %v591
    %v626 = vsel %vm610, %v497, %v593
    %v628 = vperm.slane %v457, 0
    %v630 = vsel %vm610, %v524, 0
    %v633 = vsel %vm610, %v554, 0
    %v635 = vsel %vm610, %v527, 0
    %v638 = vsel %vm610, %v555, 0
    %v640 = vsel %vm610, %v530, 0
    %v643 = vsel %vm610, %v556, 0
    %v645 = vsel %vm610, %v533, 0
    %v648 = vsel %vm610, %v557, 0
    %v650 = vsel %vm610, %v536, 0
    %v653 = vsel %vm610, %v558, 0
    %v655 = vsel %vm610, %v539, 0
    %v658 = vsel %vm610, %v559, 0
    %v660 = vsel %vm610, %v542, 0
    %v663 = vsel %vm610, %v560, 0
    %v665 = vsel %vm610, %v545, 0
    %v668 = vsel %vm610, %v561, 0
    %670 = vmatpush.msra.mxu0 %v448
    %671 = vmatpush.msra.mxu0 %v447
    %672 = vmatpush.msra.mxu0 %v446
    %673 = vmatpush.msra.mxu0 %v445
    %674 = vmatpush.msra.mxu0 %v444
    %675 = vmatpush.msra.mxu0 %v443
    %676 = vmatpush.msra.mxu0 %v442
    %677 = vmatpush.msra.mxu0 %v441
    %678 = vmatpush.msra.mxu0 %v440
    %679 = vmatpush.msra.mxu0 %v439
    %680 = vmatpush.msra.mxu0 %v438
    %681 = vmatpush.msra.mxu0 %v437
    %682 = vmatpush.msra.mxu0 %v436
    %683 = vmatpush.msra.mxu0 %v435
    %684 = vmatpush.msra.mxu0 %v434
    %685 = vmatpush.msra.mxu0 %v433
    %686 = vmatmul.f32.gmra.mxu0 %v611
    %v687 = vpop.f32.mrf.mxu0
    %v688 = vadd.f32 %v628, %v687
    %689 = vmatmul.f32.gmra.mxu0 %v612
    %v690 = vpop.f32.mrf.mxu0
    %v691 = vadd.f32 %v628, %v690
    %692 = vmatmul.f32.gmra.mxu0 %v613
    %v693 = vpop.f32.mrf.mxu0
    %v694 = vadd.f32 %v628, %v693
    %695 = vmatmul.f32.gmra.mxu0 %v614
    %v696 = vpop.f32.mrf.mxu0
    %v697 = vadd.f32 %v628, %v696
    %698 = vmatmul.f32.gmra.mxu0 %v615
    %v699 = vpop.f32.mrf.mxu0
    %v700 = vadd.f32 %v628, %v699
    %701 = vmatmul.f32.gmra.mxu0 %v616
    %v702 = vpop.f32.mrf.mxu0
    %v703 = vadd.f32 %v628, %v702
    %704 = vmatmul.f32.gmra.mxu0 %v617
    %v705 = vpop.f32.mrf.mxu0
    %v706 = vadd.f32 %v628, %v705
    %707 = vmatmul.f32.gmra.mxu0 %v618
    %v708 = vpop.f32.mrf.mxu0
    %v709 = vadd.f32 %v628, %v708
    %710 = vmatmul.f32.gmra.mxu0 %v619
    %v711 = vpop.f32.mrf.mxu0
    %v712 = vadd.f32 %v628, %v711
    %713 = vmatmul.f32.gmra.mxu0 %v620
    %v714 = vpop.f32.mrf.mxu0
    %v715 = vadd.f32 %v628, %v714
    %716 = vmatmul.f32.gmra.mxu0 %v621
    %v717 = vpop.f32.mrf.mxu0
    %v718 = vadd.f32 %v628, %v717
    %719 = vmatmul.f32.gmra.mxu0 %v622
    %v720 = vpop.f32.mrf.mxu0
    %v721 = vadd.f32 %v628, %v720
    %722 = vmatmul.f32.gmra.mxu0 %v623
    %v723 = vpop.f32.mrf.mxu0
    %v724 = vadd.f32 %v628, %v723
    %725 = vmatmul.f32.gmra.mxu0 %v624
    %v726 = vpop.f32.mrf.mxu0
    %v727 = vadd.f32 %v628, %v726
    %728 = vmatmul.f32.gmra.mxu0 %v625
    %v729 = vpop.f32.mrf.mxu0
    %v730 = vadd.f32 %v628, %v729
    %731 = vmatmul.f32.gmra.mxu0 %v626
    %v732 = vpop.f32.mrf.mxu0
    %v733 = vadd.f32 %v628, %v732
    %734 = vdwg.mxu0
    %735 = vmatpush.msra.mxu0 0.0
    %736 = vmatpush.msra.mxu0 0.0
    %737 = vmatpush.msra.mxu0 0.0
    %738 = vmatpush.msra.mxu0 0.0
    %739 = vmatpush.msra.mxu0 0.0
    %740 = vmatpush.msra.mxu0 0.0
    %741 = vmatpush.msra.mxu0 0.0
    %742 = vmatpush.msra.mxu0 0.0
    %743 = vmatpush.msra.mxu0 %v456
    %744 = vmatpush.msra.mxu0 %v455
    %745 = vmatpush.msra.mxu0 %v454
    %746 = vmatpush.msra.mxu0 %v453
    %747 = vmatpush.msra.mxu0 %v452
    %748 = vmatpush.msra.mxu0 %v451
    %749 = vmatpush.msra.mxu0 %v450
    %750 = vmatpush.msra.mxu0 %v449
    %751 = vmatmul.f32.gmra.mxu0 %v630
    %v752 = vpop.f32.mrf.mxu0
    %v753 = vadd.f32 %v688, %v752
    %754 = vmatmul.f32.gmra.mxu0 %v633
    %v755 = vpop.f32.mrf.mxu0
    %v756 = vadd.f32 %v691, %v755
    %757 = vmatmul.f32.gmra.mxu0 %v635
    %v758 = vpop.f32.mrf.mxu0
    %v759 = vadd.f32 %v694, %v758
    %760 = vmatmul.f32.gmra.mxu0 %v638
    %v761 = vpop.f32.mrf.mxu0
    %v762 = vadd.f32 %v697, %v761
    %763 = vmatmul.f32.gmra.mxu0 %v640
    %v764 = vpop.f32.mrf.mxu0
    %v765 = vadd.f32 %v700, %v764
    %766 = vmatmul.f32.gmra.mxu0 %v643
    %v767 = vpop.f32.mrf.mxu0
    %v768 = vadd.f32 %v703, %v767
    %769 = vmatmul.f32.gmra.mxu0 %v645
    %v770 = vpop.f32.mrf.mxu0
    %v771 = vadd.f32 %v706, %v770
    %772 = vmatmul.f32.gmra.mxu0 %v648
    %v773 = vpop.f32.mrf.mxu0
    %v774 = vadd.f32 %v709, %v773
    %775 = vmatmul.f32.gmra.mxu0 %v650
    %v776 = vpop.f32.mrf.mxu0
    %v777 = vadd.f32 %v712, %v776
    %778 = vmatmul.f32.gmra.mxu0 %v653
    %v779 = vpop.f32.mrf.mxu0
    %v780 = vadd.f32 %v715, %v779
    %781 = vmatmul.f32.gmra.mxu0 %v655
    %v782 = vpop.f32.mrf.mxu0
    %v783 = vadd.f32 %v718, %v782
    %784 = vmatmul.f32.gmra.mxu0 %v658
    %v785 = vpop.f32.mrf.mxu0
    %v786 = vadd.f32 %v721, %v785
    %787 = vmatmul.f32.gmra.mxu0 %v660
    %v788 = vpop.f32.mrf.mxu0
    %v789 = vadd.f32 %v724, %v788
    %790 = vmatmul.f32.gmra.mxu0 %v663
    %v791 = vpop.f32.mrf.mxu0
    %v792 = vadd.f32 %v727, %v791
    %793 = vmatmul.f32.gmra.mxu0 %v665
    %v794 = vpop.f32.mrf.mxu0
    %v795 = vadd.f32 %v730, %v794
    %796 = vmatmul.f32.gmra.mxu0 %v668
    %v797 = vpop.f32.mrf.mxu0
    %v798 = vadd.f32 %v733, %v797
    %799 = vdwg.mxu0
    %v800 = vmax.f32 %v753, 0.0
    %v801 = vmax.f32 %v756, 0.0
    %v802 = vmax.f32 %v759, 0.0
    %v803 = vmax.f32 %v762, 0.0
    %v804 = vmax.f32 %v765, 0.0
    %v805 = vmax.f32 %v768, 0.0
    %v806 = vmax.f32 %v771, 0.0
    %v807 = vmax.f32 %v774, 0.0
    %v808 = vmax.f32 %v777, 0.0
    %v809 = vmax.f32 %v780, 0.0
    %v810 = vmax.f32 %v783, 0.0
    %v811 = vmax.f32 %v786, 0.0
    %v812 = vmax.f32 %v789, 0.0
    %v813 = vmax.f32 %v792, 0.0
    %v814 = vmax.f32 %v795, 0.0
    %v815 = vmax.f32 %v798, 0.0
    %v816 = vld [vmem:[%s5] sm:$0xff]
    %v817 = vld [vmem:[%s5 + $0x8] sm:$0xff]
    %v818 = vld [vmem:[%s5 + $0x10] sm:$0xff]
    %v819 = vld [vmem:[%s5 + $0x18] sm:$0xff]
    %v820 = vld [vmem:[%s5 + $0x20] sm:$0xff]
    %v821 = vld [vmem:[%s5 + $0x28] sm:$0xff]
    %v822 = vld [vmem:[%s5 + $0x30] sm:$0xff]
    %v823 = vld [vmem:[%s5 + $0x38] sm:$0xff]
    %v824 = vld [vmem:[%s5 + $0x40] sm:$0xff]
    %v825 = vld [vmem:[%s5 + $0x48] sm:$0xff]
    %v826 = vld [vmem:[%s5 + $0x50] sm:$0xff]
    %v827 = vld [vmem:[%s5 + $0x58] sm:$0xff]
    %v828 = vld [vmem:[%s5 + $0x60] sm:$0xff]
    %v829 = vld [vmem:[%s5 + $0x68] sm:$0xff]
    %v830 = vld [vmem:[%s5 + $0x70] sm:$0xff]
    %v831 = vld [vmem:[%s5 + $0x78] sm:$0xff]
    %v832 = vld [vmem:[%s5 + $0x80] sm:$0xff]
    %v833 = vld [vmem:[%s5 + $0x88] sm:$0xff]
    %v834 = vld [vmem:[%s5 + $0x90] sm:$0xff]
    %v835 = vld [vmem:[%s5 + $0x98] sm:$0xff]
    %v836 = vld [vmem:[%s5 + $0xa0] sm:$0xff]
    %v837 = vld [vmem:[%s5 + $0xa8] sm:$0xff]
    %v838 = vld [vmem:[%s5 + $0xb0] sm:$0xff]
    %v839 = vld [vmem:[%s5 + $0xb8] sm:$0xff]
    %v840 = vld [vmem:[%s6] sm:$0x1]
    %v857 = vrot.slane %v800, 7
    %v858 = vrot.slane %v801, 7
    %v859 = vsel %vm68, %v857, %v858
    %v860 = vrot.slane %v802, 7
    %v861 = vrot.slane %v803, 7
    %v862 = vsel %vm68, %v860, %v861
    %v863 = vrot.slane %v804, 7
    %v864 = vrot.slane %v805, 7
    %v865 = vsel %vm68, %v863, %v864
    %v866 = vrot.slane %v806, 7
    %v867 = vrot.slane %v807, 7
    %v868 = vsel %vm68, %v866, %v867
    %v869 = vrot.slane %v808, 7
    %v870 = vrot.slane %v809, 7
    %v871 = vsel %vm68, %v869, %v870
    %v872 = vrot.slane %v810, 7
    %v873 = vrot.slane %v811, 7
    %v874 = vsel %vm68, %v872, %v873
    %v875 = vrot.slane %v812, 7
    %v876 = vrot.slane %v813, 7
    %v877 = vsel %vm68, %v875, %v876
    %v878 = vrot.slane %v814, 7
    %v879 = vrot.slane %v815, 7
    %v880 = vsel %vm68, %v878, %v879
    %v897 = vsel %vm68, 0.0, %v857
    %v898 = vsel %vm68, 0.0, %v860
    %v899 = vsel %vm68, 0.0, %v863
    %v900 = vsel %vm68, 0.0, %v866
    %v901 = vsel %vm68, 0.0, %v869
    %v902 = vsel %vm68, 0.0, %v872
    %v903 = vsel %vm68, 0.0, %v875
    %v904 = vsel %vm68, 0.0, %v878
    %v905 = vrot.slane %v800, 1
    %v906 = vrot.slane %v801, 1
    %v907 = vsel %vm117, %v905, %v906
    %v908 = vrot.slane %v802, 1
    %v909 = vrot.slane %v803, 1
    %v910 = vsel %vm117, %v908, %v909
    %v911 = vrot.slane %v804, 1
    %v912 = vrot.slane %v805, 1
    %v913 = vsel %vm117, %v911, %v912
    %v914 = vrot.slane %v806, 1
    %v915 = vrot.slane %v807, 1
    %v916 = vsel %vm117, %v914, %v915
    %v917 = vrot.slane %v808, 1
    %v918 = vrot.slane %v809, 1
    %v919 = vsel %vm117, %v917, %v918
    %v920 = vrot.slane %v810, 1
    %v921 = vrot.slane %v811, 1
    %v922 = vsel %vm117, %v920, %v921
    %v923 = vrot.slane %v812, 1
    %v924 = vrot.slane %v813, 1
    %v925 = vsel %vm117, %v923, %v924
    %v926 = vrot.slane %v814, 1
    %v927 = vrot.slane %v815, 1
    %v928 = vsel %vm117, %v926, %v927
    %v937 = vsel %vm117, %v906, 0.0
    %v938 = vsel %vm117, %v909, 0.0
    %v939 = vsel %vm117, %v912, 0.0
    %v940 = vsel %vm117, %v915, 0.0
    %v941 = vsel %vm117, %v918, 0.0
    %v942 = vsel %vm117, %v921, 0.0
    %v943 = vsel %vm117, %v924, 0.0
    %v944 = vsel %vm117, %v927, 0.0
    %945 = vrot.lane.b32.xlu0 %v800, 64
    %v946 = vpop.permute.xlu0 %945
    %947 = vrot.lane.b32.xlu0 %v801, 64
    %v948 = vpop.permute.xlu0 %947
    %949 = vrot.lane.b32.xlu0 %v802, 64
    %v950 = vpop.permute.xlu0 %949
    %951 = vrot.lane.b32.xlu0 %v803, 64
    %v952 = vpop.permute.xlu0 %951
    %953 = vrot.lane.b32.xlu0 %v804, 64
    %v954 = vpop.permute.xlu0 %953
    %955 = vrot.lane.b32.xlu0 %v805, 64
    %v956 = vpop.permute.xlu0 %955
    %957 = vrot.lane.b32.xlu0 %v806, 64
    %v958 = vpop.permute.xlu0 %957
    %959 = vrot.lane.b32.xlu0 %v807, 64
    %v960 = vpop.permute.xlu0 %959
    %961 = vrot.lane.b32.xlu0 %v808, 64
    %v962 = vpop.permute.xlu0 %961
    %963 = vrot.lane.b32.xlu0 %v809, 64
    %v964 = vpop.permute.xlu0 %963
    %965 = vrot.lane.b32.xlu0 %v810, 64
    %v966 = vpop.permute.xlu0 %965
    %967 = vrot.lane.b32.xlu0 %v811, 64
    %v968 = vpop.permute.xlu0 %967
    %969 = vrot.lane.b32.xlu0 %v812, 64
    %v970 = vpop.permute.xlu0 %969
    %971 = vrot.lane.b32.xlu0 %v813, 64
    %v972 = vpop.permute.xlu0 %971
    %973 = vrot.lane.b32.xlu0 %v814, 64
    %v974 = vpop.permute.xlu0 %973
    %975 = vrot.lane.b32.xlu0 %v815, 64
    %v976 = vpop.permute.xlu0 %975
    %v993 = vsel %vm610, %v897, %v946
    %v994 = vsel %vm610, %v859, %v948
    %v995 = vsel %vm610, %v898, %v950
    %v996 = vsel %vm610, %v862, %v952
    %v997 = vsel %vm610, %v899, %v954
    %v998 = vsel %vm610, %v865, %v956
    %v999 = vsel %vm610, %v900, %v958
    %v1000 = vsel %vm610, %v868, %v960
    %v1001 = vsel %vm610, %v901, %v962
    %v1002 = vsel %vm610, %v871, %v964
    %v1003 = vsel %vm610, %v902, %v966
    %v1004 = vsel %vm610, %v874, %v968
    %v1005 = vsel %vm610, %v903, %v970
    %v1006 = vsel %vm610, %v877, %v972
    %v1007 = vsel %vm610, %v904, %v974
    %v1008 = vsel %vm610, %v880, %v976
    %v1010 = vperm.slane %v840, 0
    %v1012 = vsel %vm610, %v907, 0
    %v1015 = vsel %vm610, %v937, 0
    %v1017 = vsel %vm610, %v910, 0
    %v1020 = vsel %vm610, %v938, 0
    %v1022 = vsel %vm610, %v913, 0
    %v1025 = vsel %vm610, %v939, 0
    %v1027 = vsel %vm610, %v916, 0
    %v1030 = vsel %vm610, %v940, 0
    %v1032 = vsel %vm610, %v919, 0
    %v1035 = vsel %vm610, %v941, 0
    %v1037 = vsel %vm610, %v922, 0
    %v1040 = vsel %vm610, %v942, 0
    %v1042 = vsel %vm610, %v925, 0
    %v1045 = vsel %vm610, %v943, 0
    %v1047 = vsel %vm610, %v928, 0
    %v1050 = vsel %vm610, %v944, 0
    %1052 = vmatpush.msra.mxu0 %v831
    %1053 = vmatpush.msra.mxu0 %v830
    %1054 = vmatpush.msra.mxu0 %v829
    %1055 = vmatpush.msra.mxu0 %v828
    %1056 = vmatpush.msra.mxu0 %v827
    %1057 = vmatpush.msra.mxu0 %v826
    %1058 = vmatpush.msra.mxu0 %v825
    %1059 = vmatpush.msra.mxu0 %v824
    %1060 = vmatpush.msra.mxu0 %v823
    %1061 = vmatpush.msra.mxu0 %v822
    %1062 = vmatpush.msra.mxu0 %v821
    %1063 = vmatpush.msra.mxu0 %v820
    %1064 = vmatpush.msra.mxu0 %v819
    %1065 = vmatpush.msra.mxu0 %v818
    %1066 = vmatpush.msra.mxu0 %v817
    %1067 = vmatpush.msra.mxu0 %v816
    %1068 = vmatmul.f32.gmra.mxu0 %v993
    %v1069 = vpop.f32.mrf.mxu0
    %v1070 = vadd.f32 %v1010, %v1069
    %1071 = vmatmul.f32.gmra.mxu0 %v994
    %v1072 = vpop.f32.mrf.mxu0
    %v1073 = vadd.f32 %v1010, %v1072
    %1074 = vmatmul.f32.gmra.mxu0 %v995
    %v1075 = vpop.f32.mrf.mxu0
    %v1076 = vadd.f32 %v1010, %v1075
    %1077 = vmatmul.f32.gmra.mxu0 %v996
    %v1078 = vpop.f32.mrf.mxu0
    %v1079 = vadd.f32 %v1010, %v1078
    %1080 = vmatmul.f32.gmra.mxu0 %v997
    %v1081 = vpop.f32.mrf.mxu0
    %v1082 = vadd.f32 %v1010, %v1081
    %1083 = vmatmul.f32.gmra.mxu0 %v998
    %v1084 = vpop.f32.mrf.mxu0
    %v1085 = vadd.f32 %v1010, %v1084
    %1086 = vmatmul.f32.gmra.mxu0 %v999
    %v1087 = vpop.f32.mrf.mxu0
    %v1088 = vadd.f32 %v1010, %v1087
    %1089 = vmatmul.f32.gmra.mxu0 %v1000
    %v1090 = vpop.f32.mrf.mxu0
    %v1091 = vadd.f32 %v1010, %v1090
    %1092 = vmatmul.f32.gmra.mxu0 %v1001
    %v1093 = vpop.f32.mrf.mxu0
    %v1094 = vadd.f32 %v1010, %v1093
    %1095 = vmatmul.f32.gmra.mxu0 %v1002
    %v1096 = vpop.f32.mrf.mxu0
    %v1097 = vadd.f32 %v1010, %v1096
    %1098 = vmatmul.f32.gmra.mxu0 %v1003
    %v1099 = vpop.f32.mrf.mxu0
    %v1100 = vadd.f32 %v1010, %v1099
    %1101 = vmatmul.f32.gmra.mxu0 %v1004
    %v1102 = vpop.f32.mrf.mxu0
    %v1103 = vadd.f32 %v1010, %v1102
    %1104 = vmatmul.f32.gmra.mxu0 %v1005
    %v1105 = vpop.f32.mrf.mxu0
    %v1106 = vadd.f32 %v1010, %v1105
    %1107 = vmatmul.f32.gmra.mxu0 %v1006
    %v1108 = vpop.f32.mrf.mxu0
    %v1109 = vadd.f32 %v1010, %v1108
    %1110 = vmatmul.f32.gmra.mxu0 %v1007
    %v1111 = vpop.f32.mrf.mxu0
    %v1112 = vadd.f32 %v1010, %v1111
    %1113 = vmatmul.f32.gmra.mxu0 %v1008
    %v1114 = vpop.f32.mrf.mxu0
    %v1115 = vadd.f32 %v1010, %v1114
    %1116 = vdwg.mxu0
    %1117 = vmatpush.msra.mxu0 0.0
    %1118 = vmatpush.msra.mxu0 0.0
    %1119 = vmatpush.msra.mxu0 0.0
    %1120 = vmatpush.msra.mxu0 0.0
    %1121 = vmatpush.msra.mxu0 0.0
    %1122 = vmatpush.msra.mxu0 0.0
    %1123 = vmatpush.msra.mxu0 0.0
    %1124 = vmatpush.msra.mxu0 0.0
    %1125 = vmatpush.msra.mxu0 %v839
    %1126 = vmatpush.msra.mxu0 %v838
    %1127 = vmatpush.msra.mxu0 %v837
    %1128 = vmatpush.msra.mxu0 %v836
    %1129 = vmatpush.msra.mxu0 %v835
    %1130 = vmatpush.msra.mxu0 %v834
    %1131 = vmatpush.msra.mxu0 %v833
    %1132 = vmatpush.msra.mxu0 %v832
    %1133 = vmatmul.f32.gmra.mxu0 %v1012
    %v1134 = vpop.f32.mrf.mxu0
    %v1135 = vadd.f32 %v1070, %v1134
    %1136 = vmatmul.f32.gmra.mxu0 %v1015
    %v1137 = vpop.f32.mrf.mxu0
    %v1138 = vadd.f32 %v1073, %v1137
    %1139 = vmatmul.f32.gmra.mxu0 %v1017
    %v1140 = vpop.f32.mrf.mxu0
    %v1141 = vadd.f32 %v1076, %v1140
    %1142 = vmatmul.f32.gmra.mxu0 %v1020
    %v1143 = vpop.f32.mrf.mxu0
    %v1144 = vadd.f32 %v1079, %v1143
    %1145 = vmatmul.f32.gmra.mxu0 %v1022
    %v1146 = vpop.f32.mrf.mxu0
    %v1147 = vadd.f32 %v1082, %v1146
    %1148 = vmatmul.f32.gmra.mxu0 %v1025
    %v1149 = vpop.f32.mrf.mxu0
    %v1150 = vadd.f32 %v1085, %v1149
    %1151 = vmatmul.f32.gmra.mxu0 %v1027
    %v1152 = vpop.f32.mrf.mxu0
    %v1153 = vadd.f32 %v1088, %v1152
    %1154 = vmatmul.f32.gmra.mxu0 %v1030
    %v1155 = vpop.f32.mrf.mxu0
    %v1156 = vadd.f32 %v1091, %v1155
    %1157 = vmatmul.f32.gmra.mxu0 %v1032
    %v1158 = vpop.f32.mrf.mxu0
    %v1159 = vadd.f32 %v1094, %v1158
    %1160 = vmatmul.f32.gmra.mxu0 %v1035
    %v1161 = vpop.f32.mrf.mxu0
    %v1162 = vadd.f32 %v1097, %v1161
    %1163 = vmatmul.f32.gmra.mxu0 %v1037
    %v1164 = vpop.f32.mrf.mxu0
    %v1165 = vadd.f32 %v1100, %v1164
    %1166 = vmatmul.f32.gmra.mxu0 %v1040
    %v1167 = vpop.f32.mrf.mxu0
    %v1168 = vadd.f32 %v1103, %v1167
    %1169 = vmatmul.f32.gmra.mxu0 %v1042
    %v1170 = vpop.f32.mrf.mxu0
    %v1171 = vadd.f32 %v1106, %v1170
    %1172 = vmatmul.f32.gmra.mxu0 %v1045
    %v1173 = vpop.f32.mrf.mxu0
    %v1174 = vadd.f32 %v1109, %v1173
    %1175 = vmatmul.f32.gmra.mxu0 %v1047
    %v1176 = vpop.f32.mrf.mxu0
    %v1177 = vadd.f32 %v1112, %v1176
    %1178 = vmatmul.f32.gmra.mxu0 %v1050
    %v1179 = vpop.f32.mrf.mxu0
    %v1180 = vadd.f32 %v1115, %v1179
    %1181 = vdwg.mxu0
    %v1182 = vmax.f32 %v1135, 0.0
    %v1183 = vmax.f32 %v1138, 0.0
    %v1184 = vmax.f32 %v1141, 0.0
    %v1185 = vmax.f32 %v1144, 0.0
    %v1186 = vmax.f32 %v1147, 0.0
    %v1187 = vmax.f32 %v1150, 0.0
    %v1188 = vmax.f32 %v1153, 0.0
    %v1189 = vmax.f32 %v1156, 0.0
    %v1190 = vmax.f32 %v1159, 0.0
    %v1191 = vmax.f32 %v1162, 0.0
    %v1192 = vmax.f32 %v1165, 0.0
    %v1193 = vmax.f32 %v1168, 0.0
    %v1194 = vmax.f32 %v1171, 0.0
    %v1195 = vmax.f32 %v1174, 0.0
    %v1196 = vmax.f32 %v1177, 0.0
    %v1197 = vmax.f32 %v1180, 0.0
    %v1198 = vsel %vm610, %v1182, 0.0
    %v1199 = vsel %vm610, %v1183, 0.0
    %v1200 = vadd.f32 %v1198, %v1199
    %v1201 = vrot.slane %v1200, 4
    %v1202 = vadd.f32 %v1200, %v1201
    %v1203 = vrot.slane %v1202, 2
    %v1204 = vadd.f32 %v1202, %v1203
    %v1205 = vrot.slane %v1204, 1
    %v1206 = vadd.f32 %v1204, %v1205
    %v1207 = vsel %vm610, %v1184, 0.0
    %v1208 = vsel %vm610, %v1185, 0.0
    %v1209 = vadd.f32 %v1207, %v1208
    %v1210 = vrot.slane %v1209, 4
    %v1211 = vadd.f32 %v1209, %v1210
    %v1212 = vrot.slane %v1211, 2
    %v1213 = vadd.f32 %v1211, %v1212
    %v1214 = vrot.slane %v1213, 1
    %v1215 = vadd.f32 %v1213, %v1214
    %v1216 = vsel %vm610, %v1186, 0.0
    %v1217 = vsel %vm610, %v1187, 0.0
    %v1218 = vadd.f32 %v1216, %v1217
    %v1219 = vrot.slane %v1218, 4
    %v1220 = vadd.f32 %v1218, %v1219
    %v1221 = vrot.slane %v1220, 2
    %v1222 = vadd.f32 %v1220, %v1221
    %v1223 = vrot.slane %v1222, 1
    %v1224 = vadd.f32 %v1222, %v1223
    %v1225 = vsel %vm610, %v1188, 0.0
    %v1226 = vsel %vm610, %v1189, 0.0
    %v1227 = vadd.f32 %v1225, %v1226
    %v1228 = vrot.slane %v1227, 4
    %v1229 = vadd.f32 %v1227, %v1228
    %v1230 = vrot.slane %v1229, 2
    %v1231 = vadd.f32 %v1229, %v1230
    %v1232 = vrot.slane %v1231, 1
    %v1233 = vadd.f32 %v1231, %v1232
    %v1234 = vsel %vm610, %v1190, 0.0
    %v1235 = vsel %vm610, %v1191, 0.0
    %v1236 = vadd.f32 %v1234, %v1235
    %v1237 = vrot.slane %v1236, 4
    %v1238 = vadd.f32 %v1236, %v1237
    %v1239 = vrot.slane %v1238, 2
    %v1240 = vadd.f32 %v1238, %v1239
    %v1241 = vrot.slane %v1240, 1
    %v1242 = vadd.f32 %v1240, %v1241
    %v1243 = vsel %vm610, %v1192, 0.0
    %v1244 = vsel %vm610, %v1193, 0.0
    %v1245 = vadd.f32 %v1243, %v1244
    %v1246 = vrot.slane %v1245, 4
    %v1247 = vadd.f32 %v1245, %v1246
    %v1248 = vrot.slane %v1247, 2
    %v1249 = vadd.f32 %v1247, %v1248
    %v1250 = vrot.slane %v1249, 1
    %v1251 = vadd.f32 %v1249, %v1250
    %v1252 = vsel %vm610, %v1194, 0.0
    %v1253 = vsel %vm610, %v1195, 0.0
    %v1254 = vadd.f32 %v1252, %v1253
    %v1255 = vrot.slane %v1254, 4
    %v1256 = vadd.f32 %v1254, %v1255
    %v1257 = vrot.slane %v1256, 2
    %v1258 = vadd.f32 %v1256, %v1257
    %v1259 = vrot.slane %v1258, 1
    %v1260 = vadd.f32 %v1258, %v1259
    %v1261 = vsel %vm610, %v1196, 0.0
    %v1262 = vsel %vm610, %v1197, 0.0
    %v1263 = vadd.f32 %v1261, %v1262
    %v1264 = vrot.slane %v1263, 4
    %v1265 = vadd.f32 %v1263, %v1264
    %v1266 = vrot.slane %v1265, 2
    %v1267 = vadd.f32 %v1265, %v1266
    %v1268 = vrot.slane %v1267, 1
    %v1269 = vadd.f32 %v1267, %v1268
    %v1270 = vmul.f32 %v1206, 0.0625
    %v1271 = vmul.f32 %v1215, 0.0625
    %v1272 = vmul.f32 %v1224, 0.0625
    %v1273 = vmul.f32 %v1233, 0.0625
    %v1274 = vmul.f32 %v1242, 0.0625
    %v1275 = vmul.f32 %v1251, 0.0625
    %v1276 = vmul.f32 %v1260, 0.0625
    %v1277 = vmul.f32 %v1269, 0.0625
    %v1278 = vld [vmem:[%s7] sm:$0xff]
    %v1279 = vld [vmem:[%s7 + $0x8] sm:$0xff]
    %v1280 = vld [vmem:[%s7 + $0x10] sm:$0xff]
    %v1281 = vld [vmem:[%s7 + $0x18] sm:$0xff]
    %v1282 = vld [vmem:[%s7 + $0x20] sm:$0xff]
    %v1283 = vld [vmem:[%s7 + $0x28] sm:$0xff]
    %v1284 = vld [vmem:[%s7 + $0x30] sm:$0xff]
    %v1285 = vld [vmem:[%s7 + $0x38] sm:$0xff]
    %v1286 = vld [vmem:[%s8] sm:$0x1]
    %v1288 = vperm.slane %v1286, 0
    %vm1298 = vcmask 1041409
    %v1299 = vsel %vm1298, %v1271, %v1270
    %vm1300 = vcmask 1042434
    %v1301 = vsel %vm1300, %v1272, %v1299
    %vm1302 = vcmask 1043459
    %v1303 = vsel %vm1302, %v1273, %v1301
    %vm1304 = vcmask 1044484
    %v1305 = vsel %vm1304, %v1274, %v1303
    %vm1306 = vcmask 1045509
    %v1307 = vsel %vm1306, %v1275, %v1305
    %vm1308 = vcmask 1046534
    %v1309 = vsel %vm1308, %v1276, %v1307
    %vm1310 = vcmask 1047559
    %v1311 = vsel %vm1310, %v1277, %v1309
    %v1312 = vsel %vm610, %v1311, 0
    %1314 = vmatpush.msra.mxu0 0.0
    %1315 = vmatpush.msra.mxu0 0.0
    %1316 = vmatpush.msra.mxu0 0.0
    %1317 = vmatpush.msra.mxu0 0.0
    %1318 = vmatpush.msra.mxu0 0.0
    %1319 = vmatpush.msra.mxu0 0.0
    %1320 = vmatpush.msra.mxu0 0.0
    %1321 = vmatpush.msra.mxu0 0.0
    %1322 = vmatpush.msra.mxu0 %v1285
    %1323 = vmatpush.msra.mxu0 %v1284
    %1324 = vmatpush.msra.mxu0 %v1283
    %1325 = vmatpush.msra.mxu0 %v1282
    %1326 = vmatpush.msra.mxu0 %v1281
    %1327 = vmatpush.msra.mxu0 %v1280
    %1328 = vmatpush.msra.mxu0 %v1279
    %1329 = vmatpush.msra.mxu0 %v1278
    %1330 = vmatmul.f32.gmra.mxu0 %v1312
    %v1331 = vpop.f32.mrf.mxu0
    %v1332 = vadd.f32 %v1288, %v1331
    %1333 = vdwg.mxu0
    %1334 = vst [vmem:[#allocation2] sm:$0xff] %v1332
    // Predicated region
    $region38: #{tpu_custom_call.1} parent=1 // pred_check
      _
    $region39: #{tpu_custom_call.1} parent=1 // pred_check_branch
      %1336 = sbr.rel (0) target = $region41
    $region40: #{tpu_custom_call.1} parent=1 // pred_region
      %1338 = vsyncadd [#allocation3], 0
      %s1340 = sshll.u32 [#allocation2], 4
      %s1341 = int_to_ptr.vmem [resolvable:$true] %s1340
      %s1342 = sshll.u32 %s9, 4
      %s1343 = int_to_ptr.hbm [resolvable:$true] %s1342
      %1345 = dma.vmem_to_hbm [thread:$0]  %s1341, 128, %s1343, [#allocation3]
    $region41: #{tpu_custom_call.1} parent=1 // pred_fallthru
      _
    // Predicated region
    $region42: #{tpu_custom_call.1} parent=1 // pred_check
      _
    $region43: #{tpu_custom_call.1} parent=1 // pred_check_branch
      %1347 = sbr.rel (0) target = $region45
    $region44: #{tpu_custom_call.1} parent=1 // pred_region
      %1349 = dma.done [#allocation3], 128
    $region45: #{tpu_custom_call.1} parent=1 // pred_fallthru
      _
    %1350 = vsyncpa [#allocation3], 1

</llo_original>
